<compile_context>
chip_gen: v7x
topology: tpu7x:2x2x1
jax: 0.10.0
libtpu: 0.0.40
codegen_flags: <defaults>
</compile_context>

<pallas_src>
import jax
import jax.numpy as jnp
from jax.experimental import pallas as pl
from jax.experimental.pallas import tpu as pltpu

LANES = 1024        # lane-axis width of the dense 2D view (multiple of 128)
BLOCK_ROWS = 512    # sublane rows per grid step (multiple of 8)
# Per-step block = 512 * 1024 * 4 B = 2 MiB (f32); 1 MiB for bf16.


def _fma_kernel(w_ref, b_ref, x_ref, o_ref):
    # w_ref / b_ref: (1,)-shaped SMEM scalars (scalar prefetch).
    # x_ref / o_ref: dense (rows, lanes) VMEM blocks.
    w = w_ref[0].astype(jnp.float32)
    b = b_ref[0].astype(jnp.float32)
    o_ref[...] = (x_ref[...].astype(jnp.float32) * w + b).astype(o_ref.dtype)


def _fma_2d(x2d, w_s, b_s):
    """Dense tiled path: x2d is (rows, lanes) with lanes a multiple of 128."""
    rows, lanes = x2d.shape
    # Full-dim block when rows is small (exempt from the (8,128) rule);
    # otherwise a (512, lanes) block with a partial edge block via cdiv.
    block_rows = BLOCK_ROWS if rows >= BLOCK_ROWS else rows
    grid = (pl.cdiv(rows, block_rows),)
    itemsize = jnp.dtype(x2d.dtype).itemsize

    return pl.pallas_call(
        _fma_kernel,
        out_shape=jax.ShapeDtypeStruct((rows, lanes), x2d.dtype),
        grid_spec=pltpu.PrefetchScalarGridSpec(
            num_scalar_prefetch=2,  # weight, bias -> SMEM before the grid runs
            grid=grid,
            in_specs=[pl.BlockSpec((block_rows, lanes), lambda i, w, b: (i, 0))],
            out_specs=pl.BlockSpec((block_rows, lanes), lambda i, w, b: (i, 0)),
        ),
        compiler_params=pltpu.CompilerParams(
            dimension_semantics=("parallel",),  # rows independent; 2 TCs on v7x
        ),
        cost_estimate=pl.CostEstimate(
            flops=2 * rows * lanes,
            transcendentals=0,
            bytes_accessed=2 * rows * lanes * itemsize,
        ),
    )(w_s, b_s, x2d)


def _fma_row(x_row, w_s, b_s):
    """Small-N fallback: single full-array (1, n) block (no (8,128) constraint)."""
    n = x_row.shape[1]
    itemsize = jnp.dtype(x_row.dtype).itemsize
    return pl.pallas_call(
        _fma_kernel,
        out_shape=jax.ShapeDtypeStruct((1, n), x_row.dtype),
        grid_spec=pltpu.PrefetchScalarGridSpec(
            num_scalar_prefetch=2,
            grid=(1,),
            in_specs=[pl.BlockSpec((1, n), lambda i, w, b: (0, 0))],
            out_specs=pl.BlockSpec((1, n), lambda i, w, b: (0, 0)),
        ),
        cost_estimate=pl.CostEstimate(
            flops=2 * n, transcendentals=0, bytes_accessed=2 * n * itemsize
        ),
    )(w_s, b_s, x_row)


@jax.jit
def linear_forward(x, weight, bias):
    """y = x @ weight.T + bias for in_features = out_features = 1.

    x:      (N, 1)  float32/bf16
    weight: (1, 1)  (PyTorch layout)
    bias:   (1,)
    returns (N, 1)  in x.dtype
    """
    n, k = x.shape
    assert k == 1 and weight.shape == (1, 1) and bias.shape == (1,), (
        "this kernel specializes nn.Linear(1, 1)"
    )
    dtype = x.dtype
    w_s = weight.reshape(1).astype(jnp.float32)
    b_s = bias.reshape(1).astype(jnp.float32)
    x_flat = x.reshape(-1)  # contiguous flat view of the (N, 1) data

    if n >= LANES:
        # Pick the widest lane width that divides N -> padding-free dense view.
        lanes = next((c for c in (1024, 512, 256, 128) if n % c == 0), None)
        if lanes is not None:
            out2d = _fma_2d(x_flat.reshape(n // lanes, lanes), w_s, b_s)
            return out2d.reshape(n, 1)
        # Large N not 128-aligned: dense-kernel the aligned bulk, finish the
        # (<1024-element) tail in plain jnp.  The concatenate is one extra
        # output pass but avoids the old full pad-read/write + slice passes.
        # TODO(synk): avoid the concatenate by writing the tail into an
        # aliased output buffer if misaligned huge batches become common.
        n_main = (n // LANES) * LANES
        out_main = _fma_2d(x_flat[:n_main].reshape(n_main // LANES, LANES), w_s, b_s)
        out_tail = (x_flat[n_main:].astype(jnp.float32) * w_s[0] + b_s[0]).astype(dtype)
        return jnp.concatenate([out_main.reshape(-1), out_tail]).reshape(n, 1)

    # Tiny N: launch/step overhead dominates anyway; single full-array block,
    # no padding, no slicing.
    return _fma_row(x_flat.reshape(1, n), w_s, b_s).reshape(n, 1)


if __name__ == "__main__":
    input_size = 1
    output_size = 1

    key = jax.random.PRNGKey(0)
    k_w, k_b, k_x1, k_x2, k_x3 = jax.random.split(key, 5)

    # Deterministic init mimicking nn.Linear's U(-1/sqrt(in), 1/sqrt(in)).
    bound = 1.0 / jnp.sqrt(jnp.float32(input_size))
    weight = jax.random.uniform(
        k_w, (output_size, input_size), jnp.float32, -bound, bound
    )
    bias = jax.random.uniform(k_b, (output_size,), jnp.float32, -bound, bound)

    def check(x):
        out = jax.block_until_ready(linear_forward(x, weight, bias))
        ref = x @ weight.T + bias
        assert out.shape == ref.shape
        assert jnp.allclose(out, ref, atol=1e-5, rtol=1e-5)

    # 1) Small batch (matches the module's typical use): (1, n) single-block path.
    check(jax.random.normal(k_x1, (8, input_size), jnp.float32))
    # 2) Dense lane/sublane path, single full-dim block (rows=4 < BLOCK_ROWS).
    check(jax.random.normal(k_x2, (4096, input_size), jnp.float32))
    # 3) Multi-step dense path with a partial edge block (rows=1300 -> grid=3).
    check(jax.random.normal(k_x3, (1300 * 1024, input_size), jnp.float32))

    print("KERNEL_OK")
</pallas_src>

<mosaic_0001>
module attributes {stable_mosaic.version = 11 : i64} {
  func.func @_fma_kernel(%arg0: i32, %arg1: memref<1xf32, #tpu.memory_space<smem>>, %arg2: memref<1xf32, #tpu.memory_space<smem>>, %arg3: memref<1x8xf32, #tpu.memory_space<vmem>>, %arg4: memref<1x8xf32, #tpu.memory_space<vmem>>) attributes {dimension_semantics = [#tpu.dimension_semantics<arbitrary>], iteration_bounds = array<i64: 1>, scalar_prefetch = 2 : i64, scratch_operands = 0 : i64, tpu.core_type = #tpu.core_type<tc>, window_params = [{pipeline_mode = #tpu.pipeline_mode<synchronous>, transform_indices = @transform_0, window_bounds = array<i64: 1, 8>}, {pipeline_mode = #tpu.pipeline_mode<synchronous>, transform_indices = @transform_1, window_bounds = array<i64: 1, 8>}]} {
    %c0 = arith.constant 0 : index
    %0 = memref.load %arg1[%c0] : memref<1xf32, #tpu.memory_space<smem>>
    %c0_0 = arith.constant 0 : index
    %1 = memref.load %arg2[%c0_0] : memref<1xf32, #tpu.memory_space<smem>>
    %c0_1 = arith.constant 0 : index
    %c0_2 = arith.constant 0 : index
    %2 = vector.load %arg3[%c0_1, %c0_2] : memref<1x8xf32, #tpu.memory_space<vmem>>, vector<1x8xf32>
    %3 = vector.broadcast %0 : f32 to vector<1x8xf32>
    %4 = arith.mulf %2, %3 : vector<1x8xf32>
    %5 = vector.broadcast %1 : f32 to vector<1x8xf32>
    %6 = arith.addf %4, %5 : vector<1x8xf32>
    %c0_3 = arith.constant 0 : index
    %c0_4 = arith.constant 0 : index
    %7 = vector.load %arg4[%c0_3, %c0_4] : memref<1x8xf32, #tpu.memory_space<vmem>>, vector<1x8xf32>
    tpu.vector_store %arg4[%c0_3, %c0_4], %6 {strides = array<i32>} : memref<1x8xf32, #tpu.memory_space<vmem>>, vector<1x8xf32>,
    return
  }
  func.func @transform_0(%arg0: i32, %arg1: memref<1xf32, #tpu.memory_space<smem>>, %arg2: memref<1xf32, #tpu.memory_space<smem>>) -> (i32, i32) {
    %c0_i32 = arith.constant 0 : i32
    %c0_i32_0 = arith.constant 0 : i32
    %c0_i32_1 = arith.constant 0 : i32
    return %c0_i32, %c0_i32_0 : i32, i32
  }
  func.func @transform_1(%arg0: i32, %arg1: memref<1xf32, #tpu.memory_space<smem>>, %arg2: memref<1xf32, #tpu.memory_space<smem>>) -> (i32, i32) {
    %c0_i32 = arith.constant 0 : i32
    %c0_i32_0 = arith.constant 0 : i32
    %c0_i32_1 = arith.constant 0 : i32
    return %c0_i32, %c0_i32_0 : i32, i32
  }
}

</mosaic_0001>

<llo_original>
// kernel: linear_forward.1
$region0: #{linear_forward.1}
  #allocation0 [shape = 'u32[]', space=smem, size = 0x4, offset = 0x4, fixed_abs, tag = 'smem constant byte address 0x4 - core index']
  #allocation1 [shape = 'u32[144,128]{1,0:T(1,128)}', space=vmem, size = 0x12000, scoped, tag = 'internal scratch']
  #allocation2 [shape = 's32[1]{0}', space=sflag, size = 0x4, scoped, tag = 'scoped memory for linear_forward.1']
  #allocation3 [shape = 'f32[1]{0:T(128)S(6)}', space=smem, size = 0x200, scoped, tag = 'prefetched SMEM operand 0']
  #allocation4 [shape = 'f32[1]{0:T(128)S(6)}', space=smem, size = 0x200, scoped, tag = 'prefetched SMEM operand 1']
  %s0 = inlined_call_operand.<no memory space> [shape: f32[1], index: 0, kind: input, shape index: {}]
  %s1 = inlined_call_operand.<no memory space> [shape: f32[1], index: 1, kind: input, shape index: {}]
  %s2 = inlined_call_operand.vmem [shape: f32[1,8], index: 2, kind: input, shape index: {}]
  %s3 = inlined_call_operand.hbm [shape: f32[1,8], index: 3, kind: output, shape index: {}]
  %s4 = sld [smem:[#allocation0]]
  $region14: #{linear_forward.1} parent=0
    _
  %s6 = ssub.s32 1, %s4
  %s7 = scalar_select 0, %s6, %s4
  %8 = sst [smem:[#allocation3]] %s0
  %9 = sst [smem:[#allocation4]] %s1
  $region1: #{linear_forward.1} parent=0
    #allocation5 [shape = 'u8[512]{0}', space=vmem, size = 0x400, scoped, tag = 'output window, operand 0, single buffered']
    #allocation6 [shape = 's32[1]{0}', space=sflag, size = 0x4, scoped, tag = 'scoped memory for linear_forward.1']
    %10 = vsyncpa [#allocation6], 0
    // Predicated region
    $region2: #{linear_forward.1} parent=1 // pred_check
      _
    $region3: #{linear_forward.1} parent=1 // pred_check_branch
      %12 = sbr.rel (0) target = $region5
    $region4: #{linear_forward.1} parent=1 // pred_region
      _
    $region5: #{linear_forward.1} parent=1 // pred_fallthru
      _
    %s13 = sld [smem:[#allocation3]]
    %s14 = sld [smem:[#allocation4]]
    %v15 = vld [vmem:[%s2] sm:$0x1]
    %v16 = vstv %s13
    %v17 = vmul.f32 %v15, %v16
    %v18 = vstv %s14
    %v19 = vadd.f32 %v17, %v18
    %vm20 = vcmask 57344
    %21 = vst.msk [vmem:[#allocation5] sm:$0x1] %vm20, %v19
    // Predicated region
    $region6: #{linear_forward.1} parent=1 // pred_check
      _
    $region7: #{linear_forward.1} parent=1 // pred_check_branch
      %23 = sbr.rel (0) target = $region9
    $region8: #{linear_forward.1} parent=1 // pred_region
      %s25 = ssub.s32 16, 16
      %26 = vsyncadd [#allocation6], %s25
      %s28 = sshll.u32 [#allocation5], 4
      %s29 = int_to_ptr.vmem [resolvable:$true] %s28
      %31 = dma.vmem_to_hbm [thread:$0]  %s29, 16, %s3, [#allocation6]
    $region9: #{linear_forward.1} parent=1 // pred_fallthru
      _
    // Predicated region
    $region10: #{linear_forward.1} parent=1 // pred_check
      _
    $region11: #{linear_forward.1} parent=1 // pred_check_branch
      %33 = sbr.rel (0) target = $region13
    $region12: #{linear_forward.1} parent=1 // pred_region
      %34 = dma.done [#allocation6], 16
    $region13: #{linear_forward.1} parent=1 // pred_fallthru
      _
    %35 = vsyncpa [#allocation6], 1

</llo_original>
